<compile_context>
chip_gen: v7x
topology: tpu7x:2x2x1
jax: 0.10.0
libtpu: 0.0.40
codegen_flags: <defaults>
</compile_context>

<pallas_src>
from functools import partial
import math

import jax
import jax.numpy as jnp
from jax import lax
from jax.experimental import pallas as pl
from jax.experimental.pallas import tpu as pltpu


# ------------------------- hardware-aware configuration ----------------------

def _round_up(x, m):
    return ((x + m - 1) // m) * m


def _vmem_capacity_bytes():
    """Physical VMEM per core; falls back to the v7x floor (64 MiB) if unknown."""
    try:
        cap = int(pltpu.get_tpu_info().vmem_capacity_bytes)
        if cap > 0:
            return cap
    except Exception:
        pass
    return 64 * 1024 * 1024


_VMEM_CAP = _vmem_capacity_bytes()
# Generation-aware scoped-VMEM limit: ~96 MiB on v5e/v6e (128 MiB physical),
# ~48 MiB on v7x (64 MiB physical), leaving headroom for Mosaic internals.
_VMEM_LIMIT = int(_VMEM_CAP * 3 // 4)
# v7x (64 MiB VMEM) gets smaller tiles so the in-kernel [N, tb] temporaries
# (k_nt and b) plus the resident L^{-1} stay out of spill/OOM territory.
_TILE_MAX = 256 if _VMEM_CAP <= 64 * 1024 * 1024 else 512

# Single-buffer constant-index_map inputs: they never change across the grid,
# so the default double buffering only wastes VMEM (2x the [N,N] L^{-1}).
_RESIDENT = pl.Buffered(1)


def _compiler_params(n_grid_axes):
    # TODO(synk): on v7x verify the "parallel" axes actually shard across the
    # 2 TensorCores; if not, switch to pltpu.CORE_PARALLEL / pl.core_map.
    return pltpu.CompilerParams(
        dimension_semantics=("parallel",) * n_grid_axes,
        vmem_limit_bytes=_VMEM_LIMIT,
    )


def _tile_and_pad(size, tile_max=_TILE_MAX, align=128):
    """Pick a (8,128)-aligned tile and the padded extent it evenly divides."""
    padded_min = _round_up(max(size, 1), align)
    tile = min(tile_max, padded_min)
    return tile, _round_up(size, tile)


def _pad_features(x, multiple=128):
    """Zero-pad the feature (lane) axis to a multiple of 128 (distances unchanged)."""
    d = x.shape[1]
    dp = _round_up(d, multiple)
    return x if dp == d else jnp.pad(x, ((0, 0), (0, dp - d)))


def _pad_rows(x, rows):
    r = x.shape[0]
    return x if rows == r else jnp.pad(x, ((0, rows - r), (0, 0)))


# ----------------------------- Pallas kernels --------------------------------

def _rbf_cov_kernel(x1_ref, x1_sq_ref, x2_ref, x2_sq_ref, out_ref, *, log_sf2):
    """K[i, j] = exp(-0.5 * ||x1_i - x2_j||^2 + 2 log sigma_f) (1/l pre-scaled)."""
    cross = lax.dot_general(x1_ref[...], x2_ref[...], (((1,), (1,)), ((), ())),
                            preferred_element_type=jnp.float32)        # [tm, tn] (MXU)
    d2 = jnp.maximum(x1_sq_ref[...] + x2_sq_ref[...] - 2.0 * cross, 0.0)
    # sigma_f^2 folded into the exponent: one EUP op, no extra VPU multiply.
    out_ref[...] = jnp.exp(-0.5 * d2 + log_sf2)


def rbf_covariance(x1, x1_sq_col, x2, x2_sq_row, *, sigma_f, tm, tn):
    """Full covariance matrix K(x1, x2) over a 2-D parallel (row, col) grid."""
    m, dp = x1.shape
    n = x2.shape[0]
    return pl.pallas_call(
        partial(_rbf_cov_kernel, log_sf2=2.0 * math.log(sigma_f)),
        out_shape=jax.ShapeDtypeStruct((m, n), jnp.float32),
        grid=(m // tm, n // tn),
        in_specs=[pl.BlockSpec((tm, dp), lambda i, j: (i, 0)),   # x1 row tile
                  pl.BlockSpec((tm, 1), lambda i, j: (i, 0)),    # ||x1||^2 column tile
                  pl.BlockSpec((tn, dp), lambda i, j: (j, 0)),   # x2 col tile
                  pl.BlockSpec((1, tn), lambda i, j: (0, j))],   # ||x2||^2 row tile
        out_specs=pl.BlockSpec((tm, tn), lambda i, j: (i, j)),   # lane-dense output
        compiler_params=_compiler_params(2),
    )(x1, x1_sq_col, x2, x2_sq_row)


def _posterior_kernel(xt_ref, xt_sq_ref, xn_ref, xn_sq_ref, l_inv_ref, alpha_ref,
                      mu_ref, var_ref, *, log_sf2, sigma_f, sigma_y, quad_dtype):
    xt = xt_ref[...]                                                # [tb, Dp] test tile
    xn = xn_ref[...]                                                # [N, Dp]  train (resident)
    # Covariance tile K_nt[n, t] built entirely in VMEM (never written to HBM).
    cross = lax.dot_general(xn, xt, (((1,), (1,)), ((), ())),
                            preferred_element_type=jnp.float32)     # [N, tb] (MXU)
    d2 = jnp.maximum(xn_sq_ref[...] + xt_sq_ref[...] - 2.0 * cross, 0.0)
    k_nt = jnp.exp(-0.5 * d2 + log_sf2)                             # [N, tb]
    # Dominant MXU matmul: b = L^{-1} K_nt (optionally bf16 inputs, f32 accumulate).
    b = jnp.dot(l_inv_ref[...].astype(quad_dtype), k_nt.astype(quad_dtype),
                preferred_element_type=jnp.float32)                 # [N, tb]
    # Mean folded into the same matmul:  mu = alpha^T b,  alpha = L^{-1} y.
    mu_ref[...] = jnp.sum(alpha_ref[...] * b, axis=0, keepdims=True)    # [1, tb]
    # diag(K_tt) == sigma_f^2 exactly for RBF;  quad = ||L^{-1} k_t||^2.
    quad = jnp.sum(b * b, axis=0, keepdims=True)                        # [1, tb]
    var_ref[...] = (sigma_f ** 2) - quad + sigma_y ** 2


def posterior_predictive_pallas(xt, xt_sq_row, xn, xn_sq_col, l_inv, alpha,
                                *, sigma_f, sigma_y, tb, quad_dtype=jnp.float32):
    t, dp = xt.shape
    n = xn.shape[0]
    # TODO(synk): for N too large to keep L^{-1} resident (≳2.5k on v7x), stream
    # L^{-1} in [tk, N] panels over an "arbitrary" reduction grid axis (skipping
    # panels above the diagonal) and accumulate mu/quad in VMEM scratch.
    mu, var = pl.pallas_call(
        partial(_posterior_kernel, log_sf2=2.0 * math.log(sigma_f),
                sigma_f=sigma_f, sigma_y=sigma_y, quad_dtype=quad_dtype),
        out_shape=(jax.ShapeDtypeStruct((1, t), jnp.float32),
                   jax.ShapeDtypeStruct((1, t), jnp.float32)),
        grid=(t // tb,),
        in_specs=[
            pl.BlockSpec((tb, dp), lambda i: (i, 0)),                      # X_test tile
            pl.BlockSpec((1, tb), lambda i: (0, i)),                       # ||X_test||^2 row
            pl.BlockSpec((n, dp), lambda i: (0, 0), pipeline_mode=_RESIDENT),  # X
            pl.BlockSpec((n, 1), lambda i: (0, 0), pipeline_mode=_RESIDENT),   # ||X||^2 col
            pl.BlockSpec((n, n), lambda i: (0, 0), pipeline_mode=_RESIDENT),   # L^{-1}
            pl.BlockSpec((n, 1), lambda i: (0, 0), pipeline_mode=_RESIDENT),   # alpha
        ],
        out_specs=(pl.BlockSpec((1, tb), lambda i: (0, i)),   # lane-dense mean row
                   pl.BlockSpec((1, tb), lambda i: (0, i))),  # lane-dense variance row
        compiler_params=_compiler_params(1),
    )(xt, xt_sq_row, xn, xn_sq_col, l_inv, alpha)
    return mu, var


# ------------------------------ GP wrapper ------------------------------------

class GaussianProcessPallas:
    """forward(X_test, X, y) -> (predictive mean [T], predictive variance [T])."""

    def __init__(self, num_inputs, sigma_y=0.01, log_l=0.0, log_sigma_f=0.0,
                 quad_matmul_dtype=jnp.float32):
        self.num_inputs = num_inputs
        self.sigma_y = float(sigma_y)
        self.lengthscale = float(jnp.exp(log_l))
        self.sigma_f = float(jnp.exp(log_sigma_f))
        # bf16 here gives ~2-4x on the binding MXU matmul; kept f32 by default
        # because sigma_f^2 - quad is a cancellation vs. the 1e-3 tolerance.
        self.quad_matmul_dtype = quad_matmul_dtype

    def forward(self, X_test, X=None, y=None):
        X_test = jnp.asarray(X_test, jnp.float32)
        t = X_test.shape[0]
        if X is None:
            # GP prior over the test points: zero mean; RBF marginal variance is
            # exactly sigma_f^2, so K_tt is never built.
            return (jnp.zeros((t,), jnp.float32),
                    jnp.full((t,), self.sigma_f ** 2, jnp.float32))
        assert y is not None
        X = jnp.asarray(X, jnp.float32)
        n = X.shape[0]
        y = jnp.asarray(y, jnp.float32).reshape(n, 1)

        # Pre-scale by 1/l and pad features to 128 lanes (squared distances unchanged).
        inv_l = 1.0 / self.lengthscale
        xs = _pad_features(X * inv_l)                               # [N, Dp]
        xts = _pad_features(X_test * inv_l)                         # [T, Dp]
        xs_sq = jnp.sum(xs * xs, axis=1, keepdims=True)             # [N, 1]

        # ---- K_nn = k(X, X) + sigma_y^2 I  (2-D tiled Pallas build) ---------
        tile_n, n_pad = _tile_and_pad(n)
        xs_p = _pad_rows(xs, n_pad)
        xs_sq_p = _pad_rows(xs_sq, n_pad)
        k_nn = rbf_covariance(xs_p, xs_sq_p, xs_p, xs_sq_p.T,
                              sigma_f=self.sigma_f, tm=tile_n, tn=tile_n)[:n, :n]
        k_nn = k_nn + (self.sigma_y ** 2) * jnp.eye(n, dtype=jnp.float32)

        # TODO(synk): dense Cholesky / triangular solve has no clean Pallas
        # equivalent; done in plain JAX.  K_nn^{-1} is never materialized —
        # only L^{-1} and alpha = L^{-1} y are passed to the posterior kernel.
        chol = jnp.linalg.cholesky(k_nn)
        eye = jnp.eye(n, dtype=jnp.float32)
        l_inv = jax.scipy.linalg.solve_triangular(chol, eye, lower=True)   # [N, N]
        alpha = jax.scipy.linalg.solve_triangular(chol, y, lower=True)     # [N, 1]

        # ---- fused posterior over a padded, tiled test axis ------------------
        tb, t_pad = _tile_and_pad(t)
        xts_p = _pad_rows(xts, t_pad)
        xts_sq_row = jnp.sum(xts_p * xts_p, axis=1)[None, :]        # [1, Tp]

        mu, var = posterior_predictive_pallas(
            xts_p, xts_sq_row, xs, xs_sq, l_inv, alpha,
            sigma_f=self.sigma_f, sigma_y=self.sigma_y, tb=tb,
            quad_dtype=self.quad_matmul_dtype)
        return mu[0, :t], var[0, :t]


# ------------------------------- reference ------------------------------------

def _reference(X_test, X, y, lengthscale, sigma_f, sigma_y):
    def cov(a, b):
        d2 = (jnp.sum(a * a, 1)[:, None] + jnp.sum(b * b, 1)[None, :]
              - 2.0 * a @ b.T)
        d2 = jnp.maximum(d2, 0.0)
        return sigma_f ** 2 * jnp.exp(-0.5 * d2 / lengthscale ** 2)

    n = X.shape[0]
    k_nn = cov(X, X) + sigma_y ** 2 * jnp.eye(n)
    k_nn_inv = jnp.linalg.inv(k_nn)
    k_tn = cov(X_test, X)
    k_tt = cov(X_test, X_test)
    mu = (k_tn @ k_nn_inv @ y)[:, 0]
    covar = k_tt - k_tn @ k_nn_inv @ k_tn.T
    var = jnp.diagonal(covar) + sigma_y ** 2
    return mu, var


# --------------------------------- main ----------------------------------------

if __name__ == "__main__":
    key = jax.random.PRNGKey(0)
    k1, k2, k3 = jax.random.split(key, 3)

    N, T, D = 64, 128, 8
    X = jax.random.normal(k1, (N, D), dtype=jnp.float32)
    X_test = jax.random.normal(k2, (T, D), dtype=jnp.float32)
    y = jax.random.normal(k3, (N, 1), dtype=jnp.float32)

    gp = GaussianProcessPallas(num_inputs=D, sigma_y=0.01)
    mean, var = gp.forward(X_test, X, y)
    mean = jax.block_until_ready(mean)
    var = jax.block_until_ready(var)

    ref_mean, ref_var = _reference(X_test, X, y, gp.lengthscale, gp.sigma_f, gp.sigma_y)
    assert mean.shape == (T,) and var.shape == (T,)
    assert jnp.allclose(mean, ref_mean, atol=1e-3, rtol=1e-3)
    assert jnp.allclose(var, ref_var, atol=1e-3, rtol=1e-3)

    # Prior path (X=None): zero mean, sigma_f^2 marginal variance.
    prior_mu, prior_var = gp.forward(X_test)
    prior_mu = jax.block_until_ready(prior_mu)
    assert prior_mu.shape == (T,) and prior_var.shape == (T,)

    print("KERNEL_OK")
</pallas_src>

<mosaic_0001>
module attributes {stable_mosaic.version = 11 : i64} {
  func.func @_rbf_cov_kernel(%arg0: i32, %arg1: i32, %arg2: memref<128x128xf32, #tpu.memory_space<vmem>>, %arg3: memref<128x1xf32, #tpu.memory_space<vmem>>, %arg4: memref<128x128xf32, #tpu.memory_space<vmem>>, %arg5: memref<1x128xf32, #tpu.memory_space<vmem>>, %arg6: memref<128x128xf32, #tpu.memory_space<vmem>>) attributes {dimension_semantics = [#tpu.dimension_semantics<parallel>, #tpu.dimension_semantics<parallel>], iteration_bounds = array<i64: 1, 1>, scalar_prefetch = 0 : i64, scratch_operands = 0 : i64, tpu.core_type = #tpu.core_type<tc>, window_params = [{transform_indices = @transform_0, window_bounds = array<i64: 128, 128>}, {transform_indices = @transform_1, window_bounds = array<i64: 128, 1>}, {transform_indices = @transform_2, window_bounds = array<i64: 128, 128>}, {transform_indices = @transform_3, window_bounds = array<i64: 1, 128>}, {transform_indices = @transform_4, window_bounds = array<i64: 128, 128>}]} {
    %c0 = arith.constant 0 : index
    %c0_0 = arith.constant 0 : index
    %0 = vector.load %arg2[%c0, %c0_0] : memref<128x128xf32, #tpu.memory_space<vmem>>, vector<128x128xf32>
    %c0_1 = arith.constant 0 : index
    %c0_2 = arith.constant 0 : index
    %1 = vector.load %arg4[%c0_1, %c0_2] : memref<128x128xf32, #tpu.memory_space<vmem>>, vector<128x128xf32>
    %cst = arith.constant dense<0.000000e+00> : vector<128x128xf32>
    %2 = tpu.matmul %0, %1, %cst {dimension_numbers = #tpu.dot_dimension_numbers<[1], [1], [0], [0], [0, 0, 1, 0], [], []>} : vector<128x128xf32>, vector<128x128xf32>, vector<128x128xf32> -> vector<128x128xf32>
    %c0_3 = arith.constant 0 : index
    %c0_4 = arith.constant 0 : index
    %3 = vector.load %arg3[%c0_3, %c0_4] : memref<128x1xf32, #tpu.memory_space<vmem>>, vector<128x1xf32>
    %c0_5 = arith.constant 0 : index
    %c0_6 = arith.constant 0 : index
    %4 = vector.load %arg5[%c0_5, %c0_6] : memref<1x128xf32, #tpu.memory_space<vmem>>, vector<1x128xf32>
    %5 = vector.broadcast %3 : vector<128x1xf32> to vector<128x128xf32>
    %6 = vector.broadcast %4 : vector<1x128xf32> to vector<128x128xf32>
    %7 = arith.addf %5, %6 : vector<128x128xf32>
    %cst_7 = arith.constant 2.000000e+00 : f32
    %8 = vector.broadcast %cst_7 : f32 to vector<128x128xf32>
    %9 = arith.mulf %8, %2 : vector<128x128xf32>
    %10 = arith.subf %7, %9 : vector<128x128xf32>
    %cst_8 = arith.constant 0.000000e+00 : f32
    %11 = vector.broadcast %cst_8 : f32 to vector<128x128xf32>
    %12 = arith.maximumf %10, %11 : vector<128x128xf32>
    %cst_9 = arith.constant -5.000000e-01 : f32
    %13 = vector.broadcast %cst_9 : f32 to vector<128x128xf32>
    %14 = arith.mulf %13, %12 : vector<128x128xf32>
    %cst_10 = arith.constant 0.000000e+00 : f32
    %15 = vector.broadcast %cst_10 : f32 to vector<128x128xf32>
    %16 = arith.addf %14, %15 : vector<128x128xf32>
    %17 = math.exp %16 : vector<128x128xf32>
    %c0_11 = arith.constant 0 : index
    %c0_12 = arith.constant 0 : index
    %18 = vector.load %arg6[%c0_11, %c0_12] : memref<128x128xf32, #tpu.memory_space<vmem>>, vector<128x128xf32>
    tpu.vector_store %arg6[%c0_11, %c0_12], %17 {strides = array<i32>} : memref<128x128xf32, #tpu.memory_space<vmem>>, vector<128x128xf32>,
    return
  }
  func.func @transform_0(%arg0: i32, %arg1: i32) -> (i32, i32) {
    %c0_i32 = arith.constant 0 : i32
    %c0_i32_0 = arith.constant 0 : i32
    return %arg0, %c0_i32 : i32, i32
  }
  func.func @transform_1(%arg0: i32, %arg1: i32) -> (i32, i32) {
    %c0_i32 = arith.constant 0 : i32
    %c0_i32_0 = arith.constant 0 : i32
    return %arg0, %c0_i32 : i32, i32
  }
  func.func @transform_2(%arg0: i32, %arg1: i32) -> (i32, i32) {
    %c0_i32 = arith.constant 0 : i32
    %c0_i32_0 = arith.constant 0 : i32
    return %arg1, %c0_i32 : i32, i32
  }
  func.func @transform_3(%arg0: i32, %arg1: i32) -> (i32, i32) {
    %c0_i32 = arith.constant 0 : i32
    %c0_i32_0 = arith.constant 0 : i32
    return %c0_i32, %arg1 : i32, i32
  }
  func.func @transform_4(%arg0: i32, %arg1: i32) -> (i32, i32) {
    %c0_i32 = arith.constant 0 : i32
    return %arg0, %arg1 : i32, i32
  }
}

</mosaic_0001>

<llo_original>
// kernel: tpu_custom_call.1
$region0: #{tpu_custom_call.1}
  #allocation0 [shape = 'u32[]', space=smem, size = 0x4, offset = 0x4, fixed_abs, tag = 'smem constant byte address 0x4 - core index']
  #allocation1 [shape = 'u32[144,128]{1,0:T(1,128)}', space=vmem, size = 0x12000, scoped, tag = 'internal scratch']
  %s0 = inlined_call_operand.vmem [shape: f32[128,128], index: 0, kind: input, shape index: {}]
  %s1 = inlined_call_operand.vmem [shape: f32[128,1], index: 1, kind: input, shape index: {}]
  %s2 = inlined_call_operand.hbm [shape: f32[128,128], index: 2, kind: input, shape index: {}]
  %s3 = inlined_call_operand.vmem [shape: f32[1,128], index: 3, kind: input, shape index: {}]
  %s4 = inlined_call_operand.hbm [shape: f32[128,128], index: 4, kind: output, shape index: {}]
  %s5 = sld [smem:[#allocation0]]
  $region30: #{tpu_custom_call.1} parent=0
    _
  %s7 = ssub.s32 1, %s5
  %s8 = scalar_select 0, %s7, %s5
  $region1: #{tpu_custom_call.1} parent=0
    #allocation2 [shape = 'u8[65536]{0}', space=vmem, size = 0x10000, scoped, tag = 'input window, operand 2, single buffered']
    #allocation3 [shape = 's32[1]{0}', space=sflag, size = 0x4, scoped, tag = 'scoped memory for tpu_custom_call.1']
    #allocation4 [shape = 's32[1]{0}', space=sflag, size = 0x4, scoped, tag = 'scoped memory for tpu_custom_call.1']
    #allocation5 [shape = 'u8[65536]{0}', space=vmem, size = 0x10000, scoped, tag = 'output window, operand 0, single buffered']
    %9 = vsyncpa [#allocation3], 0
    %10 = vsyncpa [#allocation4], 0
    // Predicated region
    $region2: #{tpu_custom_call.1} parent=1 // pred_check
      _
    $region3: #{tpu_custom_call.1} parent=1 // pred_check_branch
      %12 = sbr.rel (0) target = $region5
    $region4: #{tpu_custom_call.1} parent=1 // pred_region
      _
    $region5: #{tpu_custom_call.1} parent=1 // pred_fallthru
      _
    // Predicated region
    $region6: #{tpu_custom_call.1} parent=1 // pred_check
      _
    $region7: #{tpu_custom_call.1} parent=1 // pred_check_branch
      %14 = sbr.rel (0) target = $region9
    $region8: #{tpu_custom_call.1} parent=1 // pred_region
      _
    $region9: #{tpu_custom_call.1} parent=1 // pred_fallthru
      _
    // Predicated region
    $region10: #{tpu_custom_call.1} parent=1 // pred_check
      _
    $region11: #{tpu_custom_call.1} parent=1 // pred_check_branch
      %16 = sbr.rel (0) target = $region13
    $region12: #{tpu_custom_call.1} parent=1 // pred_region
      %s18 = ssub.s32 2048, 2048
      %19 = vsyncadd [#allocation3], %s18
      %s20 = sshll.u32 [#allocation2], 4
      %s21 = int_to_ptr.vmem [resolvable:$true] %s20
      %26 = dma.hbm_to_vmem [thread:$0]  %s2, 2048, %s21, [#allocation3], 128, 128, 8
    $region13: #{tpu_custom_call.1} parent=1 // pred_fallthru
      _
    // Predicated region
    $region14: #{tpu_custom_call.1} parent=1 // pred_check
      _
    $region15: #{tpu_custom_call.1} parent=1 // pred_check_branch
      %28 = sbr.rel (0) target = $region17
    $region16: #{tpu_custom_call.1} parent=1 // pred_region
      _
    $region17: #{tpu_custom_call.1} parent=1 // pred_fallthru
      _
    // Predicated region
    $region18: #{tpu_custom_call.1} parent=1 // pred_check
      _
    $region19: #{tpu_custom_call.1} parent=1 // pred_check_branch
      %30 = sbr.rel (0) target = $region21
    $region20: #{tpu_custom_call.1} parent=1 // pred_region
      %31 = dma.done [#allocation3], 2048
    $region21: #{tpu_custom_call.1} parent=1 // pred_fallthru
      _
    %v32 = vld [vmem:[%s0] sm:$0xff]
    %v33 = vld [vmem:[%s0 + $0x8] sm:$0xff]
    %v34 = vld [vmem:[%s0 + $0x10] sm:$0xff]
    %v35 = vld [vmem:[%s0 + $0x18] sm:$0xff]
    %v36 = vld [vmem:[%s0 + $0x20] sm:$0xff]
    %v37 = vld [vmem:[%s0 + $0x28] sm:$0xff]
    %v38 = vld [vmem:[%s0 + $0x30] sm:$0xff]
    %v39 = vld [vmem:[%s0 + $0x38] sm:$0xff]
    %v40 = vld [vmem:[%s0 + $0x40] sm:$0xff]
    %v41 = vld [vmem:[%s0 + $0x48] sm:$0xff]
    %v42 = vld [vmem:[%s0 + $0x50] sm:$0xff]
    %v43 = vld [vmem:[%s0 + $0x58] sm:$0xff]
    %v44 = vld [vmem:[%s0 + $0x60] sm:$0xff]
    %v45 = vld [vmem:[%s0 + $0x68] sm:$0xff]
    %v46 = vld [vmem:[%s0 + $0x70] sm:$0xff]
    %v47 = vld [vmem:[%s0 + $0x78] sm:$0xff]
    %v48 = vld [vmem:[#allocation2] sm:$0xff]
    %v49 = vld [vmem:[#allocation2 + $0x8] sm:$0xff]
    %v50 = vld [vmem:[#allocation2 + $0x10] sm:$0xff]
    %v51 = vld [vmem:[#allocation2 + $0x18] sm:$0xff]
    %v52 = vld [vmem:[#allocation2 + $0x20] sm:$0xff]
    %v53 = vld [vmem:[#allocation2 + $0x28] sm:$0xff]
    %v54 = vld [vmem:[#allocation2 + $0x30] sm:$0xff]
    %v55 = vld [vmem:[#allocation2 + $0x38] sm:$0xff]
    %v56 = vld [vmem:[#allocation2 + $0x40] sm:$0xff]
    %v57 = vld [vmem:[#allocation2 + $0x48] sm:$0xff]
    %v58 = vld [vmem:[#allocation2 + $0x50] sm:$0xff]
    %v59 = vld [vmem:[#allocation2 + $0x58] sm:$0xff]
    %v60 = vld [vmem:[#allocation2 + $0x60] sm:$0xff]
    %v61 = vld [vmem:[#allocation2 + $0x68] sm:$0xff]
    %v62 = vld [vmem:[#allocation2 + $0x70] sm:$0xff]
    %v63 = vld [vmem:[#allocation2 + $0x78] sm:$0xff]
    %64 = vmatprep.subr.mxu0 0.0
    %65 = vmatpush1.xpose.msra.mxu0 %v48
    %66 = vmatprep.subr.mxu0 0.0
    %67 = vmatpush1.xpose.msra.mxu0 %v49
    %68 = vmatprep.subr.mxu0 0.0
    %69 = vmatpush1.xpose.msra.mxu0 %v50
    %70 = vmatprep.subr.mxu0 0.0
    %71 = vmatpush1.xpose.msra.mxu0 %v51
    %72 = vmatprep.subr.mxu0 0.0
    %73 = vmatpush1.xpose.msra.mxu0 %v52
    %74 = vmatprep.subr.mxu0 0.0
    %75 = vmatpush1.xpose.msra.mxu0 %v53
    %76 = vmatprep.subr.mxu0 0.0
    %77 = vmatpush1.xpose.msra.mxu0 %v54
    %78 = vmatprep.subr.mxu0 0.0
    %79 = vmatpush1.xpose.msra.mxu0 %v55
    %80 = vmatprep.subr.mxu0 0.0
    %81 = vmatpush1.xpose.msra.mxu0 %v56
    %82 = vmatprep.subr.mxu0 0.0
    %83 = vmatpush1.xpose.msra.mxu0 %v57
    %84 = vmatprep.subr.mxu0 0.0
    %85 = vmatpush1.xpose.msra.mxu0 %v58
    %86 = vmatprep.subr.mxu0 0.0
    %87 = vmatpush1.xpose.msra.mxu0 %v59
    %88 = vmatprep.subr.mxu0 0.0
    %89 = vmatpush1.xpose.msra.mxu0 %v60
    %90 = vmatprep.subr.mxu0 0.0
    %91 = vmatpush1.xpose.msra.mxu0 %v61
    %92 = vmatprep.subr.mxu0 0.0
    %93 = vmatpush1.xpose.msra.mxu0 %v62
    %94 = vmatprep.subr.mxu0 0.0
    %95 = vmatpush1.xpose.msra.mxu0 %v63
    %96 = vmatprep.subr.mxu0 0.0
    %97 = vmatpush1.xpose.msra.mxu0 0.0
    %98 = vmatprep.subr.mxu0 0.0
    %99 = vmatpush1.xpose.msra.mxu0 0.0
    %100 = vmatprep.subr.mxu0 0.0
    %101 = vmatpush1.xpose.msra.mxu0 0.0
    %102 = vmatprep.subr.mxu0 0.0
    %103 = vmatpush1.xpose.msra.mxu0 0.0
    %104 = vmatprep.subr.mxu0 0.0
    %105 = vmatpush1.xpose.msra.mxu0 0.0
    %106 = vmatprep.subr.mxu0 0.0
    %107 = vmatpush1.xpose.msra.mxu0 0.0
    %108 = vmatprep.subr.mxu0 0.0
    %109 = vmatpush1.xpose.msra.mxu0 0.0
    %110 = vmatprep.subr.mxu0 0.0
    %111 = vmatpush1.xpose.msra.mxu0 0.0
    %112 = vmatprep.subr.mxu0 0.0
    %113 = vmatpush1.xpose.msra.mxu0 0.0
    %114 = vmatprep.subr.mxu0 0.0
    %115 = vmatpush1.xpose.msra.mxu0 0.0
    %116 = vmatprep.subr.mxu0 0.0
    %117 = vmatpush1.xpose.msra.mxu0 0.0
    %118 = vmatprep.subr.mxu0 0.0
    %119 = vmatpush1.xpose.msra.mxu0 0.0
    %120 = vmatprep.subr.mxu0 0.0
    %121 = vmatpush1.xpose.msra.mxu0 0.0
    %122 = vmatprep.subr.mxu0 0.0
    %123 = vmatpush1.xpose.msra.mxu0 0.0
    %124 = vmatprep.subr.mxu0 0.0
    %125 = vmatpush1.xpose.msra.mxu0 0.0
    %126 = vmatprep.subr.mxu0 0.0
    %127 = vmatpush1.xpose.msra.mxu0 0.0
    %128 = vmatprep.mubr.f32.mxu0 0.0
    %129 = vmatmul.mubr.f32.gmra.mrb[0].mxu0 %v32
    %v130 = vpop.f32.mrb[0].mxu0
    %v131 = vadd.f32 0.0, %v130
    %v132 = vpop.f32.mrb[0].mxu0
    %133 = vmatprep.mubr.f32.mxu0 0.0
    %134 = vmatmul.mubr.f32.gmra.mrb[0].mxu0 %v33
    %v135 = vpop.f32.mrb[0].mxu0
    %v136 = vadd.f32 0.0, %v135
    %v137 = vpop.f32.mrb[0].mxu0
    %138 = vmatprep.mubr.f32.mxu0 0.0
    %139 = vmatmul.mubr.f32.gmra.mrb[0].mxu0 %v34
    %v140 = vpop.f32.mrb[0].mxu0
    %v141 = vadd.f32 0.0, %v140
    %v142 = vpop.f32.mrb[0].mxu0
    %143 = vmatprep.mubr.f32.mxu0 0.0
    %144 = vmatmul.mubr.f32.gmra.mrb[0].mxu0 %v35
    %v145 = vpop.f32.mrb[0].mxu0
    %v146 = vadd.f32 0.0, %v145
    %v147 = vpop.f32.mrb[0].mxu0
    %148 = vmatprep.mubr.f32.mxu0 0.0
    %149 = vmatmul.mubr.f32.gmra.mrb[0].mxu0 %v36
    %v150 = vpop.f32.mrb[0].mxu0
    %v151 = vadd.f32 0.0, %v150
    %v152 = vpop.f32.mrb[0].mxu0
    %153 = vmatprep.mubr.f32.mxu0 0.0
    %154 = vmatmul.mubr.f32.gmra.mrb[0].mxu0 %v37
    %v155 = vpop.f32.mrb[0].mxu0
    %v156 = vadd.f32 0.0, %v155
    %v157 = vpop.f32.mrb[0].mxu0
    %158 = vmatprep.mubr.f32.mxu0 0.0
    %159 = vmatmul.mubr.f32.gmra.mrb[0].mxu0 %v38
    %v160 = vpop.f32.mrb[0].mxu0
    %v161 = vadd.f32 0.0, %v160
    %v162 = vpop.f32.mrb[0].mxu0
    %163 = vmatprep.mubr.f32.mxu0 0.0
    %164 = vmatmul.mubr.f32.gmra.mrb[0].mxu0 %v39
    %v165 = vpop.f32.mrb[0].mxu0
    %v166 = vadd.f32 0.0, %v165
    %v167 = vpop.f32.mrb[0].mxu0
    %168 = vmatprep.mubr.f32.mxu0 0.0
    %169 = vmatmul.mubr.f32.gmra.mrb[0].mxu0 %v40
    %v170 = vpop.f32.mrb[0].mxu0
    %v171 = vadd.f32 0.0, %v170
    %v172 = vpop.f32.mrb[0].mxu0
    %173 = vmatprep.mubr.f32.mxu0 0.0
    %174 = vmatmul.mubr.f32.gmra.mrb[0].mxu0 %v41
    %v175 = vpop.f32.mrb[0].mxu0
    %v176 = vadd.f32 0.0, %v175
    %v177 = vpop.f32.mrb[0].mxu0
    %178 = vmatprep.mubr.f32.mxu0 0.0
    %179 = vmatmul.mubr.f32.gmra.mrb[0].mxu0 %v42
    %v180 = vpop.f32.mrb[0].mxu0
    %v181 = vadd.f32 0.0, %v180
    %v182 = vpop.f32.mrb[0].mxu0
    %183 = vmatprep.mubr.f32.mxu0 0.0
    %184 = vmatmul.mubr.f32.gmra.mrb[0].mxu0 %v43
    %v185 = vpop.f32.mrb[0].mxu0
    %v186 = vadd.f32 0.0, %v185
    %v187 = vpop.f32.mrb[0].mxu0
    %188 = vmatprep.mubr.f32.mxu0 0.0
    %189 = vmatmul.mubr.f32.gmra.mrb[0].mxu0 %v44
    %v190 = vpop.f32.mrb[0].mxu0
    %v191 = vadd.f32 0.0, %v190
    %v192 = vpop.f32.mrb[0].mxu0
    %193 = vmatprep.mubr.f32.mxu0 0.0
    %194 = vmatmul.mubr.f32.gmra.mrb[0].mxu0 %v45
    %v195 = vpop.f32.mrb[0].mxu0
    %v196 = vadd.f32 0.0, %v195
    %v197 = vpop.f32.mrb[0].mxu0
    %198 = vmatprep.mubr.f32.mxu0 0.0
    %199 = vmatmul.mubr.f32.gmra.mrb[0].mxu0 %v46
    %v200 = vpop.f32.mrb[0].mxu0
    %v201 = vadd.f32 0.0, %v200
    %v202 = vpop.f32.mrb[0].mxu0
    %203 = vmatprep.mubr.f32.mxu0 0.0
    %204 = vmatmul.mubr.f32.gmra.mrb[0].mxu0 %v47
    %v205 = vpop.f32.mrb[0].mxu0
    %v206 = vadd.f32 0.0, %v205
    %v207 = vpop.f32.mrb[0].mxu0
    %208 = vdwg.mxu0
    %v209 = vld [vmem:[%s1] sm:$0xff]
    %v210 = vld [vmem:[%s1 + $0x8] sm:$0xff]
    %v211 = vld [vmem:[%s1 + $0x10] sm:$0xff]
    %v212 = vld [vmem:[%s1 + $0x18] sm:$0xff]
    %v213 = vld [vmem:[%s1 + $0x20] sm:$0xff]
    %v214 = vld [vmem:[%s1 + $0x28] sm:$0xff]
    %v215 = vld [vmem:[%s1 + $0x30] sm:$0xff]
    %v216 = vld [vmem:[%s1 + $0x38] sm:$0xff]
    %v217 = vld [vmem:[%s1 + $0x40] sm:$0xff]
    %v218 = vld [vmem:[%s1 + $0x48] sm:$0xff]
    %v219 = vld [vmem:[%s1 + $0x50] sm:$0xff]
    %v220 = vld [vmem:[%s1 + $0x58] sm:$0xff]
    %v221 = vld [vmem:[%s1 + $0x60] sm:$0xff]
    %v222 = vld [vmem:[%s1 + $0x68] sm:$0xff]
    %v223 = vld [vmem:[%s1 + $0x70] sm:$0xff]
    %v224 = vld [vmem:[%s1 + $0x78] sm:$0xff]
    %v225 = vld [vmem:[%s3] sm:$0x1]
    %227 = vset.pattern.permute.xlu0 0
    %228 = vperm.xlu0 %227, %v209
    %v229 = vpop.permute.xlu0 %228
    %232 = vset.pattern.permute.xlu0 0
    %233 = vperm.xlu0 %232, %v210
    %v234 = vpop.permute.xlu0 %233
    %237 = vset.pattern.permute.xlu0 0
    %238 = vperm.xlu0 %237, %v211
    %v239 = vpop.permute.xlu0 %238
    %242 = vset.pattern.permute.xlu0 0
    %243 = vperm.xlu0 %242, %v212
    %v244 = vpop.permute.xlu0 %243
    %247 = vset.pattern.permute.xlu0 0
    %248 = vperm.xlu0 %247, %v213
    %v249 = vpop.permute.xlu0 %248
    %252 = vset.pattern.permute.xlu0 0
    %253 = vperm.xlu0 %252, %v214
    %v254 = vpop.permute.xlu0 %253
    %257 = vset.pattern.permute.xlu0 0
    %258 = vperm.xlu0 %257, %v215
    %v259 = vpop.permute.xlu0 %258
    %262 = vset.pattern.permute.xlu0 0
    %263 = vperm.xlu0 %262, %v216
    %v264 = vpop.permute.xlu0 %263
    %267 = vset.pattern.permute.xlu0 0
    %268 = vperm.xlu0 %267, %v217
    %v269 = vpop.permute.xlu0 %268
    %272 = vset.pattern.permute.xlu0 0
    %273 = vperm.xlu0 %272, %v218
    %v274 = vpop.permute.xlu0 %273
    %277 = vset.pattern.permute.xlu0 0
    %278 = vperm.xlu0 %277, %v219
    %v279 = vpop.permute.xlu0 %278
    %282 = vset.pattern.permute.xlu0 0
    %283 = vperm.xlu0 %282, %v220
    %v284 = vpop.permute.xlu0 %283
    %287 = vset.pattern.permute.xlu0 0
    %288 = vperm.xlu0 %287, %v221
    %v289 = vpop.permute.xlu0 %288
    %292 = vset.pattern.permute.xlu0 0
    %293 = vperm.xlu0 %292, %v222
    %v294 = vpop.permute.xlu0 %293
    %297 = vset.pattern.permute.xlu0 0
    %298 = vperm.xlu0 %297, %v223
    %v299 = vpop.permute.xlu0 %298
    %302 = vset.pattern.permute.xlu0 0
    %303 = vperm.xlu0 %302, %v224
    %v304 = vpop.permute.xlu0 %303
    %v307 = vlaneseq
    %v308 = vshrl.u32 %v307, 7
    %v309 = vsub.s32 0, %v308
    %v310 = vrot.slane %v225, %v309
    %v312 = vadd.f32 %v229, %v310
    %v313 = vadd.f32 %v234, %v310
    %v314 = vadd.f32 %v239, %v310
    %v315 = vadd.f32 %v244, %v310
    %v316 = vadd.f32 %v249, %v310
    %v317 = vadd.f32 %v254, %v310
    %v318 = vadd.f32 %v259, %v310
    %v319 = vadd.f32 %v264, %v310
    %v320 = vadd.f32 %v269, %v310
    %v321 = vadd.f32 %v274, %v310
    %v322 = vadd.f32 %v279, %v310
    %v323 = vadd.f32 %v284, %v310
    %v324 = vadd.f32 %v289, %v310
    %v325 = vadd.f32 %v294, %v310
    %v326 = vadd.f32 %v299, %v310
    %v327 = vadd.f32 %v304, %v310
    %v328 = vmul.f32 %v131, 2.0
    %v329 = vmul.f32 %v136, 2.0
    %v330 = vmul.f32 %v141, 2.0
    %v331 = vmul.f32 %v146, 2.0
    %v332 = vmul.f32 %v151, 2.0
    %v333 = vmul.f32 %v156, 2.0
    %v334 = vmul.f32 %v161, 2.0
    %v335 = vmul.f32 %v166, 2.0
    %v336 = vmul.f32 %v171, 2.0
    %v337 = vmul.f32 %v176, 2.0
    %v338 = vmul.f32 %v181, 2.0
    %v339 = vmul.f32 %v186, 2.0
    %v340 = vmul.f32 %v191, 2.0
    %v341 = vmul.f32 %v196, 2.0
    %v342 = vmul.f32 %v201, 2.0
    %v343 = vmul.f32 %v206, 2.0
    %v344 = vsub.f32 %v312, %v328
    %v345 = vsub.f32 %v313, %v329
    %v346 = vsub.f32 %v314, %v330
    %v347 = vsub.f32 %v315, %v331
    %v348 = vsub.f32 %v316, %v332
    %v349 = vsub.f32 %v317, %v333
    %v350 = vsub.f32 %v318, %v334
    %v351 = vsub.f32 %v319, %v335
    %v352 = vsub.f32 %v320, %v336
    %v353 = vsub.f32 %v321, %v337
    %v354 = vsub.f32 %v322, %v338
    %v355 = vsub.f32 %v323, %v339
    %v356 = vsub.f32 %v324, %v340
    %v357 = vsub.f32 %v325, %v341
    %v358 = vsub.f32 %v326, %v342
    %v359 = vsub.f32 %v327, %v343
    %v360 = vmax.f32 %v344, 0.0
    %v361 = vmax.f32 %v345, 0.0
    %v362 = vmax.f32 %v346, 0.0
    %v363 = vmax.f32 %v347, 0.0
    %v364 = vmax.f32 %v348, 0.0
    %v365 = vmax.f32 %v349, 0.0
    %v366 = vmax.f32 %v350, 0.0
    %v367 = vmax.f32 %v351, 0.0
    %v368 = vmax.f32 %v352, 0.0
    %v369 = vmax.f32 %v353, 0.0
    %v370 = vmax.f32 %v354, 0.0
    %v371 = vmax.f32 %v355, 0.0
    %v372 = vmax.f32 %v356, 0.0
    %v373 = vmax.f32 %v357, 0.0
    %v374 = vmax.f32 %v358, 0.0
    %v375 = vmax.f32 %v359, 0.0
    %v376 = vmul.f32 %v360, -0.5
    %v377 = vmul.f32 %v361, -0.5
    %v378 = vmul.f32 %v362, -0.5
    %v379 = vmul.f32 %v363, -0.5
    %v380 = vmul.f32 %v364, -0.5
    %v381 = vmul.f32 %v365, -0.5
    %v382 = vmul.f32 %v366, -0.5
    %v383 = vmul.f32 %v367, -0.5
    %v384 = vmul.f32 %v368, -0.5
    %v385 = vmul.f32 %v369, -0.5
    %v386 = vmul.f32 %v370, -0.5
    %v387 = vmul.f32 %v371, -0.5
    %v388 = vmul.f32 %v372, -0.5
    %v389 = vmul.f32 %v373, -0.5
    %v390 = vmul.f32 %v374, -0.5
    %v391 = vmul.f32 %v375, -0.5
    %v392 = vadd.f32 %v376, 0.0
    %v393 = vadd.f32 %v377, 0.0
    %v394 = vadd.f32 %v378, 0.0
    %v395 = vadd.f32 %v379, 0.0
    %v396 = vadd.f32 %v380, 0.0
    %v397 = vadd.f32 %v381, 0.0
    %v398 = vadd.f32 %v382, 0.0
    %v399 = vadd.f32 %v383, 0.0
    %v400 = vadd.f32 %v384, 0.0
    %v401 = vadd.f32 %v385, 0.0
    %v402 = vadd.f32 %v386, 0.0
    %v403 = vadd.f32 %v387, 0.0
    %v404 = vadd.f32 %v388, 0.0
    %v405 = vadd.f32 %v389, 0.0
    %v406 = vadd.f32 %v390, 0.0
    %v407 = vadd.f32 %v391, 0.0
    %v408 = vmul.f32 %v392, 1.442695
    %v409 = vpow.pop %v408
    %v410 = vmul.f32 %v393, 1.442695
    %v411 = vpow.pop %v410
    %v412 = vmul.f32 %v394, 1.442695
    %v413 = vpow.pop %v412
    %v414 = vmul.f32 %v395, 1.442695
    %v415 = vpow.pop %v414
    %v416 = vmul.f32 %v396, 1.442695
    %v417 = vpow.pop %v416
    %v418 = vmul.f32 %v397, 1.442695
    %v419 = vpow.pop %v418
    %v420 = vmul.f32 %v398, 1.442695
    %v421 = vpow.pop %v420
    %v422 = vmul.f32 %v399, 1.442695
    %v423 = vpow.pop %v422
    %v424 = vmul.f32 %v400, 1.442695
    %v425 = vpow.pop %v424
    %v426 = vmul.f32 %v401, 1.442695
    %v427 = vpow.pop %v426
    %v428 = vmul.f32 %v402, 1.442695
    %v429 = vpow.pop %v428
    %v430 = vmul.f32 %v403, 1.442695
    %v431 = vpow.pop %v430
    %v432 = vmul.f32 %v404, 1.442695
    %v433 = vpow.pop %v432
    %v434 = vmul.f32 %v405, 1.442695
    %v435 = vpow.pop %v434
    %v436 = vmul.f32 %v406, 1.442695
    %v437 = vpow.pop %v436
    %v438 = vmul.f32 %v407, 1.442695
    %v439 = vpow.pop %v438
    %440 = vst [vmem:[#allocation5] sm:$0xff] %v409
    %441 = vst [vmem:[#allocation5 + $0x8] sm:$0xff] %v411
    %442 = vst [vmem:[#allocation5 + $0x10] sm:$0xff] %v413
    %443 = vst [vmem:[#allocation5 + $0x18] sm:$0xff] %v415
    %444 = vst [vmem:[#allocation5 + $0x20] sm:$0xff] %v417
    %445 = vst [vmem:[#allocation5 + $0x28] sm:$0xff] %v419
    %446 = vst [vmem:[#allocation5 + $0x30] sm:$0xff] %v421
    %447 = vst [vmem:[#allocation5 + $0x38] sm:$0xff] %v423
    %448 = vst [vmem:[#allocation5 + $0x40] sm:$0xff] %v425
    %449 = vst [vmem:[#allocation5 + $0x48] sm:$0xff] %v427
    %450 = vst [vmem:[#allocation5 + $0x50] sm:$0xff] %v429
    %451 = vst [vmem:[#allocation5 + $0x58] sm:$0xff] %v431
    %452 = vst [vmem:[#allocation5 + $0x60] sm:$0xff] %v433
    %453 = vst [vmem:[#allocation5 + $0x68] sm:$0xff] %v435
    %454 = vst [vmem:[#allocation5 + $0x70] sm:$0xff] %v437
    %455 = vst [vmem:[#allocation5 + $0x78] sm:$0xff] %v439
    // Predicated region
    $region22: #{tpu_custom_call.1} parent=1 // pred_check
      _
    $region23: #{tpu_custom_call.1} parent=1 // pred_check_branch
      %457 = sbr.rel (0) target = $region25
    $region24: #{tpu_custom_call.1} parent=1 // pred_region
      %s459 = ssub.s32 2048, 2048
      %460 = vsyncadd [#allocation4], %s459
      %s461 = sshll.u32 [#allocation5], 4
      %s462 = int_to_ptr.vmem [resolvable:$true] %s461
      %467 = dma.vmem_to_hbm [thread:$0]  %s462, 2048, %s4, [#allocation4], 128, 128, 8
    $region25: #{tpu_custom_call.1} parent=1 // pred_fallthru
      _
    // Predicated region
    $region26: #{tpu_custom_call.1} parent=1 // pred_check
      _
    $region27: #{tpu_custom_call.1} parent=1 // pred_check_branch
      %469 = sbr.rel (0) target = $region29
    $region28: #{tpu_custom_call.1} parent=1 // pred_region
      %470 = dma.done [#allocation4], 2048
    $region29: #{tpu_custom_call.1} parent=1 // pred_fallthru
      _
    %471 = vsyncpa [#allocation3], 1
    %472 = vsyncpa [#allocation4], 1

</llo_original>
